<compile_context>
chip_gen: v7x
topology: tpu7x:2x2x1
jax: 0.10.0
libtpu: 0.0.40
codegen_flags: <defaults>
</compile_context>

<pallas_src>
import math
from functools import partial

import jax
import jax.numpy as jnp
from jax import lax
from jax.experimental import pallas as pl
from jax.experimental.pallas import tpu as pltpu


def _lorentz_self_attn_kernel(x_ref, scale_ref, o_ref, *, compute_dtype):
    """Self-attention path: one (block_b, L, D) slab serves as Q, K and V."""
    x = x_ref[...]                                  # (block_b, L, D)
    inv_scale2 = 2.0 / scale_ref[0]

    # Fold the Lorentz signature and 2/scale straight into the MXU operands:
    #   (2/scale) * <q, k>_L = (q * 2/scale) · (k with time coordinate negated)
    lane = lax.broadcasted_iota(jnp.int32, x.shape, 2)
    k_op = jnp.where(lane == 0, -x, x).astype(compute_dtype)
    q_op = (x * inv_scale2).astype(compute_dtype)

    s = jnp.einsum("bld,bmd->blm", q_op, k_op,
                   preferred_element_type=jnp.float32)       # scores, (block_b, L, L)

    # Softmax numerator only: +2/scale and +bias are constant along the softmax axis (shift
    # invariance) and the positive per-row sum cancels in the Lorentz mid-point rsqrt below.
    p = jnp.exp(s - jnp.max(s, axis=-1, keepdims=True))

    ave = jnp.einsum("blm,bmd->bld", p.astype(compute_dtype), x.astype(compute_dtype),
                     preferred_element_type=jnp.float32)     # (block_b, L, D)

    sq = ave * ave
    l_inner = jnp.sum(sq, axis=-1, keepdims=True) - 2.0 * sq[:, :, 0:1]   # <ave, ave>_L
    o_ref[...] = (ave * lax.rsqrt(jnp.maximum(jnp.abs(l_inner), 1e-8))).astype(o_ref.dtype)


def _lorentz_attn_kernel(q_ref, k_ref, v_ref, scale_ref, o_ref, *, compute_dtype):
    """General path: distinct Q, K, V slabs."""
    q = q_ref[...]
    k = k_ref[...]
    v = v_ref[...]
    inv_scale2 = 2.0 / scale_ref[0]

    lane = lax.broadcasted_iota(jnp.int32, k.shape, 2)
    k_op = jnp.where(lane == 0, -k, k).astype(compute_dtype)
    q_op = (q * inv_scale2).astype(compute_dtype)

    s = jnp.einsum("bld,bmd->blm", q_op, k_op, preferred_element_type=jnp.float32)
    p = jnp.exp(s - jnp.max(s, axis=-1, keepdims=True))

    ave = jnp.einsum("blm,bmd->bld", p.astype(compute_dtype), v.astype(compute_dtype),
                     preferred_element_type=jnp.float32)

    sq = ave * ave
    l_inner = jnp.sum(sq, axis=-1, keepdims=True) - 2.0 * sq[:, :, 0:1]
    o_ref[...] = (ave * lax.rsqrt(jnp.maximum(jnp.abs(l_inner), 1e-8))).astype(o_ref.dtype)


def _vmem_budget_bytes():
    """Per-TensorCore VMEM budget with headroom for compiler scratch (generation aware)."""
    try:
        cap = int(pltpu.get_tpu_info().vmem_capacity_bytes)
    except Exception:
        cap = 64 << 20          # conservative fallback: v7x has 64 MiB per TensorCore
    return max(16 << 20, int(cap * 0.65))


def lorentz_self_attention(q, k=None, v=None, *, scale, bias=None, mask=None,
                           block_b=None, use_bf16_matmul=False, vmem_limit_bytes=None):
    """q, k, v: (B, L, D) float32; scale: (1,) float32.

    bias cancels exactly in the softmax (shift invariance) and is unused.
    When k/v are omitted (or are the same array object as q) the deduplicated
    self-attention kernel is used (single input DMA).
    """
    if mask is not None:
        # TODO(synk): pad + causal triu mask path (masked_fill with -2**32+1) not implemented.
        raise NotImplementedError("mask path not implemented")
    del bias

    self_path = (k is None) or (v is None) or (k is q and v is q)
    B, L, D = q.shape
    itemsize = q.dtype.itemsize

    # Per-batch-element VMEM footprint: double-buffered in/out blocks + in-kernel tiles.
    n_in = 1 if self_path else 3
    per_elem = (2 * (n_in + 1) * L * D * itemsize       # pipelined input/output blocks
                + 2 * L * L * 4                          # scores + probabilities (f32)
                + 6 * L * D * 4)                         # q_op/k_op/ave/sq/out intermediates
    budget = _vmem_budget_bytes()

    if block_b is None:
        # Target >= ~1 MiB input slabs (amortizes per-grid-step overhead), bounded by the
        # per-TC VMEM budget and the batch size.
        target = max(1, (1 << 20) // max(1, L * D * itemsize))
        block_b = max(1, min(target, budget // per_elem, B))
    if B >= 2:
        block_b = min(block_b, pl.cdiv(B, 2))   # >= 2 grid steps => megacore sharding (v7x)
    block_b = max(1, min(block_b, B))
    grid = (pl.cdiv(B, block_b),)               # partial last block masked by Pallas

    if vmem_limit_bytes is None:
        vmem_limit_bytes = int(min(max(per_elem * block_b + (4 << 20), 16 << 20), budget))

    compute_dtype = jnp.bfloat16 if use_bf16_matmul else jnp.float32
    block = pl.BlockSpec((block_b, L, D), lambda b: (b, 0, 0))
    scale_spec = pl.BlockSpec(memory_space=pltpu.SMEM)   # whole (1,) parameter in SMEM
    out_shape = jax.ShapeDtypeStruct((B, L, D), q.dtype)
    cparams = pltpu.CompilerParams(
        dimension_semantics=("parallel",),
        vmem_limit_bytes=vmem_limit_bytes,
    )

    if self_path:
        return pl.pallas_call(
            partial(_lorentz_self_attn_kernel, compute_dtype=compute_dtype),
            out_shape=out_shape,
            grid=grid,
            in_specs=[block, scale_spec],
            out_specs=pl.BlockSpec((block_b, L, D), lambda b: (b, 0, 0)),
            compiler_params=cparams,
        )(q, scale)

    return pl.pallas_call(
        partial(_lorentz_attn_kernel, compute_dtype=compute_dtype),
        out_shape=out_shape,
        grid=grid,
        in_specs=[
            block,
            pl.BlockSpec((block_b, L, D), lambda b: (b, 0, 0)),
            pl.BlockSpec((block_b, L, D), lambda b: (b, 0, 0)),
            scale_spec,
        ],
        out_specs=pl.BlockSpec((block_b, L, D), lambda b: (b, 0, 0)),
        compiler_params=cparams,
    )(q, k, v, scale)


def _reference(q, k, v, scale, bias):
    """Pure-JAX reference mirroring the PyTorch forward (mask=None)."""
    sign = jnp.concatenate(
        [-jnp.ones((1,), jnp.float32), jnp.ones((q.shape[-1] - 1,), jnp.float32)]
    )
    cinner = jnp.einsum("bld,bmd->blm", q * sign, k)
    attn = (2.0 + 2.0 * cinner) / scale[0] + bias[0]
    attn = jax.nn.softmax(attn, axis=-1)
    ave = jnp.einsum("blm,bmd->bld", attn, v)
    l_inner = jnp.sum(ave * ave * sign, axis=-1, keepdims=True)
    denom = jnp.sqrt(jnp.maximum(jnp.abs(l_inner), 1e-8))
    return ave / denom


if __name__ == "__main__":
    B, L, D = 2, 8, 32   # batch=2, seq=8, lorentz dimension (d_emb)=32

    key = jax.random.PRNGKey(0)
    kq, kk, kv = jax.random.split(key, 3)
    x = jax.random.normal(kq, (B, L, D), dtype=jnp.float32)

    # Deterministic parameter init, exactly as in __init__:
    scale = jnp.array([math.sqrt(D)], dtype=jnp.float32)  # nn.Parameter(tensor([sqrt(d)]))
    bias = jnp.zeros((1,), dtype=jnp.float32)             # nn.Parameter(zeros(()))

    # Self-attention path (Q = K = V): deduplicated single-input kernel.
    out_self = jax.block_until_ready(lorentz_self_attention(x, scale=scale, bias=bias))
    ref_self = _reference(x, x, x, scale, bias)
    assert out_self.shape == (B, L, D)
    assert jnp.allclose(out_self, ref_self, atol=1e-4, rtol=1e-4), "self path mismatch"

    # General path (distinct Q, K, V).
    k_in = jax.random.normal(kk, (B, L, D), dtype=jnp.float32)
    v_in = jax.random.normal(kv, (B, L, D), dtype=jnp.float32)
    out_gen = jax.block_until_ready(
        lorentz_self_attention(x, k_in, v_in, scale=scale, bias=bias))
    ref_gen = _reference(x, k_in, v_in, scale, bias)
    assert jnp.allclose(out_gen, ref_gen, atol=1e-4, rtol=1e-4), "general path mismatch"

    print("KERNEL_OK")
</pallas_src>

<mosaic_0001>
module attributes {stable_mosaic.version = 11 : i64} {
  func.func @_lorentz_self_attn_kernel(%arg0: i32, %arg1: memref<1x8x32xf32, #tpu.memory_space<vmem>>, %arg2: memref<1xf32, #tpu.memory_space<smem>>, %arg3: memref<1x8x32xf32, #tpu.memory_space<vmem>>) attributes {dimension_semantics = [#tpu.dimension_semantics<parallel>], iteration_bounds = array<i64: 2>, scalar_prefetch = 0 : i64, scratch_operands = 0 : i64, tpu.core_type = #tpu.core_type<tc>, window_params = [{transform_indices = @transform_0, window_bounds = array<i64: 1, 8, 32>}, {transform_indices = @transform_1, window_bounds = array<i64: 1>}, {transform_indices = @transform_2, window_bounds = array<i64: 1, 8, 32>}]} {
    %c0 = arith.constant 0 : index
    %c0_0 = arith.constant 0 : index
    %c0_1 = arith.constant 0 : index
    %0 = vector.load %arg1[%c0, %c0_0, %c0_1] : memref<1x8x32xf32, #tpu.memory_space<vmem>>, vector<1x8x32xf32>
    %c0_2 = arith.constant 0 : index
    %1 = memref.load %arg2[%c0_2] : memref<1xf32, #tpu.memory_space<smem>>
    %cst = arith.constant 2.000000e+00 : f32
    %2 = arith.divf %cst, %1 : f32
    %3 = tpu.iota {dimensions = array<i32: 2>} : vector<1x8x32xi32>
    %c0_i32 = arith.constant 0 : i32
    %4 = vector.broadcast %c0_i32 : i32 to vector<1x8x32xi32>
    %5 = arith.cmpi eq, %3, %4 : vector<1x8x32xi32>
    %cst_3 = arith.constant 0.000000e+00 : f32
    %6 = vector.broadcast %cst_3 : f32 to vector<1x8x32xf32>
    %7 = arith.subf %6, %0 : vector<1x8x32xf32>
    %8 = arith.select %5, %7, %0 : vector<1x8x32xi1>, vector<1x8x32xf32>
    %9 = vector.broadcast %2 : f32 to vector<1x8x32xf32>
    %10 = arith.mulf %0, %9 : vector<1x8x32xf32>
    "tpu.trace_start"() <{level = 10 : i32, message = "bld,bmd->blm"}> : () -> ()
    %cst_4 = arith.constant dense<0.000000e+00> : vector<1x8x8xf32>
    %11 = tpu.matmul %10, %8, %cst_4 {dimension_numbers = #tpu.dot_dimension_numbers<[2], [2], [1], [1], [0, 0, 0, 1, 1, 1], [0], [0]>} : vector<1x8x32xf32>, vector<1x8x32xf32>, vector<1x8x8xf32> -> vector<1x8x8xf32>
    "tpu.trace_stop"() : () -> ()
    %cst_5 = arith.constant dense<0xFF800000> : vector<1x8xf32>
    %12 = vector.multi_reduction <maximumf>, %11, %cst_5 [2] : vector<1x8x8xf32> to vector<1x8xf32>
    %13 = vector.shape_cast %12 : vector<1x8xf32> to vector<1x8x1xf32>
    %14 = vector.broadcast %13 : vector<1x8x1xf32> to vector<1x8x8xf32>
    %15 = arith.subf %11, %14 : vector<1x8x8xf32>
    %16 = math.exp %15 : vector<1x8x8xf32>
    "tpu.trace_start"() <{level = 10 : i32, message = "blm,bmd->bld"}> : () -> ()
    %cst_6 = arith.constant dense<0.000000e+00> : vector<1x8x32xf32>
    %17 = tpu.matmul %16, %0, %cst_6 {dimension_numbers = #tpu.dot_dimension_numbers<[2], [1], [1], [2], [0, 0, 0, 1, 1, 2], [0], [0]>} : vector<1x8x8xf32>, vector<1x8x32xf32>, vector<1x8x32xf32> -> vector<1x8x32xf32>
    "tpu.trace_stop"() : () -> ()
    %18 = arith.mulf %17, %17 : vector<1x8x32xf32>
    %cst_7 = arith.constant dense<0.000000e+00> : vector<1x8xf32>
    %19 = vector.multi_reduction <add>, %18, %cst_7 [2] : vector<1x8x32xf32> to vector<1x8xf32>
    %20 = vector.shape_cast %19 : vector<1x8xf32> to vector<1x8x1xf32>
    %21 = vector.extract_strided_slice %18 {offsets = [0, 0, 0], sizes = [1, 8, 1], strides = [1, 1, 1]} : vector<1x8x32xf32> to vector<1x8x1xf32>
    %cst_8 = arith.constant 2.000000e+00 : f32
    %22 = vector.broadcast %cst_8 : f32 to vector<1x8x1xf32>
    %23 = arith.mulf %22, %21 : vector<1x8x1xf32>
    %24 = arith.subf %20, %23 : vector<1x8x1xf32>
    %25 = math.absf %24 : vector<1x8x1xf32>
    %cst_9 = arith.constant 9.99999993E-9 : f32
    %26 = vector.broadcast %cst_9 : f32 to vector<1x8x1xf32>
    %27 = arith.maximumf %25, %26 : vector<1x8x1xf32>
    %28 = math.rsqrt %27 : vector<1x8x1xf32>
    %29 = vector.broadcast %28 : vector<1x8x1xf32> to vector<1x8x32xf32>
    %30 = arith.mulf %17, %29 : vector<1x8x32xf32>
    %c0_10 = arith.constant 0 : index
    %c0_11 = arith.constant 0 : index
    %c0_12 = arith.constant 0 : index
    %31 = vector.load %arg3[%c0_10, %c0_11, %c0_12] : memref<1x8x32xf32, #tpu.memory_space<vmem>>, vector<1x8x32xf32>
    tpu.vector_store %arg3[%c0_10, %c0_11, %c0_12], %30 {strides = array<i32>} : memref<1x8x32xf32, #tpu.memory_space<vmem>>, vector<1x8x32xf32>,
    return
  }
  func.func @transform_0(%arg0: i32) -> (i32, i32, i32) {
    %c0_i32 = arith.constant 0 : i32
    %c0_i32_0 = arith.constant 0 : i32
    %c0_i32_1 = arith.constant 0 : i32
    return %arg0, %c0_i32, %c0_i32_0 : i32, i32, i32
  }
  func.func @transform_1(%arg0: i32) -> i32 {
    %c0_i32 = arith.constant 0 : i32
    %c0_i32_0 = arith.constant 0 : i32
    return %c0_i32 : i32
  }
  func.func @transform_2(%arg0: i32) -> (i32, i32, i32) {
    %c0_i32 = arith.constant 0 : i32
    %c0_i32_0 = arith.constant 0 : i32
    %c0_i32_1 = arith.constant 0 : i32
    return %arg0, %c0_i32, %c0_i32_0 : i32, i32, i32
  }
}

</mosaic_0001>

<llo_original>
// kernel: tpu_custom_call.1
$region0: #{tpu_custom_call.1}
  #allocation0 [shape = 'u32[]', space=smem, size = 0x4, offset = 0x4, fixed_abs, tag = 'smem constant byte address 0x4 - core index']
  #allocation1 [shape = 'u32[144,128]{1,0:T(1,128)}', space=vmem, size = 0x12000, scoped, tag = 'internal scratch']
  #allocation2 [shape = 'f32[1]{0:T(128)S(6)}', space=smem, size = 0x200, scoped, tag = 'scoped memory for tpu_custom_call.1']
  %s0 = inlined_call_operand.hbm [shape: f32[2,8,32], index: 0, kind: input, shape index: {}]
  %s1 = inlined_call_operand.<no memory space> [shape: f32[1], index: 1, kind: input, shape index: {}]
  %s2 = inlined_call_operand.hbm [shape: f32[2,8,32], index: 2, kind: output, shape index: {}]
  %s3 = sld [smem:[#allocation0]]
  $region45: #{tpu_custom_call.1} parent=0
    _
  %s5 = ssub.s32 1, %s3
  %s6 = scalar_select 0, %s5, %s3
  %7 = sst [smem:[#allocation2]] %s1
  $region1: #{tpu_custom_call.1} parent=0
    #allocation3 [shape = 'u8[8192]{0}', space=vmem, size = 0x2000, scoped, tag = 'input window, operand 0']
    #allocation4 [shape = 's32[2]{0}', space=sflag, size = 0x8, scoped, tag = 'scoped memory for tpu_custom_call.1']
    #allocation5 [shape = 's32[2]{0}', space=sflag, size = 0x8, scoped, tag = 'scoped memory for tpu_custom_call.1']
    #allocation6 [shape = 'u8[8192]{0}', space=vmem, size = 0x2000, scoped, tag = 'output window, operand 0']
    %8 = vsyncpa [#allocation4], 0
    %s9 = scalar_lea.sflag [#allocation4], 1
    %10 = vsyncpa %s9, 0
    %11 = vsyncpa [#allocation5], 0
    %s12 = scalar_lea.sflag [#allocation5], 1
    %13 = vsyncpa %s12, 0
    loop: start=0, step=1, limit=4
    $region2: #{tpu_custom_call.1} parent=1 // loop_pre_header
      _
    $region3: #{tpu_custom_call.1} parent=1 // loop_header
      %s15 = sphi 0, %s19
      %p16 = scmp.ge.s32.totalorder %s15, 4
      %s25 = sphi 0, %s27
      %s28 = sphi 0, %s25
      %s29 = sphi 0, %s28
      %s45 = sphi 0, %s29
      %s49 = sphi 0, %s49
      %s51 = sphi 0, %s49
      %s52 = sphi 0, %s51
      %s66 = sphi 0, %s52
      %s72 = sphi 0, %s74
      %s75 = sphi 0, %s72
      %s76 = sphi 0, %s75
      %s92 = sphi 0, %s76
    $region4: #{tpu_custom_call.1} parent=1 // loop_header_branch
      %18 = sbr.rel (%p16) target = $region8
    $region5: #{tpu_custom_call.1} parent=1 // loop_body
      %s20 = ssub.s32 %s15, 1
      %s21 = ssub.s32 %s15, 2
      %s22 = sadd.s32 %s15, 1
      %s23 = ssub.s32 %s15, %s22
      %p24 = scmp.eq.s32.totalorder %s23, 0
      %s26 = sadd.s32 %s25, 1
      %s27 = scalar_select %p24, %s25, %s26
      %p30 = pneg %p24
      %p31 = scmp.eq.s32.totalorder %s15, 1
      %p32 = por %p30, %p31
      %p33 = scmp.ne.s32.totalorder %s25, %s28
      %p34 = scmp.eq.s32.totalorder %s15, 0
      %p35 = por %p33, %p34
      %p36 = scmp.ne.s32.totalorder %s25, %s28
      %p37 = scmp.eq.s32.totalorder %s20, 1
      %p38 = por %p36, %p37
      %p39 = scmp.ne.s32.totalorder %s28, %s29
      %p40 = scmp.eq.s32.totalorder %s20, 0
      %p41 = por %p39, %p40
      %p42 = scmp.ne.s32.totalorder %s28, %s29
      %p43 = scmp.eq.s32.totalorder %s21, 1
      %p44 = por %p42, %p43
      %p46 = scmp.ne.s32.totalorder %s29, %s45
      %p47 = scmp.eq.s32.totalorder %s21, 0
      %p48 = por %p46, %p47
      %s50 = sadd.s32 %s49, 1
      %p53 = scmp.eq.s32.totalorder %s15, 1
      %p54 = scmp.ne.s32.totalorder %s49, %s51
      %p55 = scmp.eq.s32.totalorder %s15, 0
      %p56 = por %p54, %p55
      %p57 = scmp.ne.s32.totalorder %s49, %s51
      %p58 = scmp.eq.s32.totalorder %s20, 1
      %p59 = por %p57, %p58
      %p60 = scmp.ne.s32.totalorder %s51, %s52
      %p61 = scmp.eq.s32.totalorder %s20, 0
      %p62 = por %p60, %p61
      %p63 = scmp.ne.s32.totalorder %s51, %s52
      %p64 = scmp.eq.s32.totalorder %s21, 1
      %p65 = por %p63, %p64
      %p67 = scmp.ne.s32.totalorder %s52, %s66
      %p68 = scmp.eq.s32.totalorder %s21, 0
      %p69 = por %p67, %p68
      %s70 = ssub.s32 %s15, %s22
      %p71 = scmp.eq.s32.totalorder %s70, 0
      %s73 = sadd.s32 %s72, 1
      %s74 = scalar_select %p71, %s72, %s73
      %p77 = pneg %p71
      %p78 = scmp.eq.s32.totalorder %s15, 1
      %p79 = por %p77, %p78
      %p80 = scmp.ne.s32.totalorder %s72, %s75
      %p81 = scmp.eq.s32.totalorder %s15, 0
      %p82 = por %p80, %p81
      %p83 = scmp.ne.s32.totalorder %s72, %s75
      %p84 = scmp.eq.s32.totalorder %s20, 1
      %p85 = por %p83, %p84
      %p86 = scmp.ne.s32.totalorder %s75, %s76
      %p87 = scmp.eq.s32.totalorder %s20, 0
      %p88 = por %p86, %p87
      %p89 = scmp.ne.s32.totalorder %s75, %s76
      %p90 = scmp.eq.s32.totalorder %s21, 1
      %p91 = por %p89, %p90
      %p93 = scmp.ne.s32.totalorder %s76, %s92
      %p94 = scmp.eq.s32.totalorder %s21, 0
      %p95 = por %p93, %p94
      %p96 = scmp.le.s32.totalorder 1, %s15
      %p97 = scmp.lt.s32.totalorder %s15, 3
      %p98 = pnand %p96, %p97
      %p99 = pneg %p98
      // Predicated region
      $region9: #{tpu_custom_call.1} parent=5 // pred_check
        _
      $region10: #{tpu_custom_call.1} parent=5 // pred_check_branch
        %101 = sbr.rel (%p98) target = $region12
      $region11: #{tpu_custom_call.1} parent=5 // pred_region
        %s102 = ssub.s32 %s15, 1
        // Predicated region
        $region13: #{tpu_custom_call.1} parent=11 // pred_check
          %p103 = pneg %p62
        $region14: #{tpu_custom_call.1} parent=11 // pred_check_branch
          %105 = sbr.rel (%p103) target = $region16
        $region15: #{tpu_custom_call.1} parent=11 // pred_region
          _
        $region16: #{tpu_custom_call.1} parent=11 // pred_fallthru
          _
      $region12: #{tpu_custom_call.1} parent=5 // pred_fallthru
        _
      %p106 = scmp.lt.s32.totalorder %s15, 2
      // Predicated region
      $region17: #{tpu_custom_call.1} parent=5 // pred_check
        %p107 = pneg %p106
      $region18: #{tpu_custom_call.1} parent=5 // pred_check_branch
        %109 = sbr.rel (%p107) target = $region20
      $region19: #{tpu_custom_call.1} parent=5 // pred_region
        // Predicated region
        $region21: #{tpu_custom_call.1} parent=19 // pred_check
          %p110 = pneg %p35
        $region22: #{tpu_custom_call.1} parent=19 // pred_check_branch
          %112 = sbr.rel (%p110) target = $region24
        $region23: #{tpu_custom_call.1} parent=19 // pred_region
          %s113 = sand.u32 %s25, 1
          %s114 = scalar_lea.sflag [#allocation4], %s113
          %s115 = sand.u32 %s25, 1
          %s116 = smul.addr %s115, 8
          %s117 = scalar_lea.vmem [#allocation3], %s116
          %s119 = ssub.s32 128, 128
          %120 = vsyncadd %s114, %s119
          %s121 = smul.addr %s15, 128
          %s122 = scalar_lea.hbm %s0, %s121
          %s124 = sshll.u32 %s117, 4
          %s125 = int_to_ptr.vmem [resolvable:$true] %s124
          %127 = dma.hbm_to_vmem [thread:$0]  %s122, 128, %s125, %s114
        $region24: #{tpu_custom_call.1} parent=19 // pred_fallthru
          _
      $region20: #{tpu_custom_call.1} parent=5 // pred_fallthru
        _
      %p128 = scmp.le.s32.totalorder 1, %s15
      %p129 = scmp.lt.s32.totalorder %s15, 3
      %p130 = pnand %p128, %p129
      %p131 = pneg %p130
      // Predicated region
      $region25: #{tpu_custom_call.1} parent=5 // pred_check
        _
      $region26: #{tpu_custom_call.1} parent=5 // pred_check_branch
        %133 = sbr.rel (%p130) target = $region28
      $region27: #{tpu_custom_call.1} parent=5 // pred_region
        %s134 = ssub.s32 %s15, 1
        %s135 = sand.u32 %s28, 1
        %s136 = scalar_lea.sflag [#allocation4], %s135
        %s137 = sand.u32 %s28, 1
        %s138 = smul.addr %s137, 8
        %s139 = scalar_lea.vmem [#allocation3], %s138
        // Predicated region
        $region29: #{tpu_custom_call.1} parent=27 // pred_check
          %p140 = pneg %p41
        $region30: #{tpu_custom_call.1} parent=27 // pred_check_branch
          %142 = sbr.rel (%p140) target = $region32
        $region31: #{tpu_custom_call.1} parent=27 // pred_region
          %143 = dma.done %s136, 128
        $region32: #{tpu_custom_call.1} parent=27 // pred_fallthru
          _
        %s144 = sand.u32 %s28, 1
        %s145 = scalar_lea.sflag [#allocation4], %s144
        %s146 = sand.u32 %s28, 1
        %s147 = smul.addr %s146, 8
        %s148 = scalar_lea.vmem [#allocation3], %s147
        %p149 = pneg %p41
        %p150 = pneg %p38
        %p151 = pneg %p62
        %p152 = pneg %p59
        %p153 = pneg %p88
        %p154 = pneg %p85
        %s155 = sand.u32 %s75, 1
        %s156 = scalar_lea.sflag [#allocation5], %s155
        %s157 = sand.u32 %s75, 1
        %s158 = smul.addr %s157, 8
        %s159 = scalar_lea.vmem [#allocation6], %s158
        %v160 = vld [vmem:[%s139] sm:$0xff]
        %s161 = sld [smem:[#allocation2]]
        %v162 = vstv %s161
        %v163 = vrcp.pop %v162
        %s164 = vtos %v163
        %s165 = smul.f32 2.0, %s164
        %v166 = vlaneseq
        %v167 = vand.u32 %v166, 127
        %vm168 = vcmp.eq.s32.totalorder %v167, 0
        %v169 = vsub.f32 0.0, %v160
        %v170 = vsel %vm168, %v169, %v160
        %v171 = vstv %s165
        %v172 = vmul.f32 %v160, %v171
        %vm173 = vcmask 261120
        %v175 = vsel %vm173, %v172, 0
        %v178 = vsel %vm173, %v170, 0
        %180 = vmatprep.subr.mxu0 0.0
        %181 = vmatpush1.xpose.msra.mxu0 %v178
        %182 = vmatprep.subr.mxu0 0.0
        %183 = vmatpush1.xpose.msra.mxu0 0.0
        %184 = vmatprep.subr.mxu0 0.0
        %185 = vmatpush1.xpose.msra.mxu0 0.0
        %186 = vmatprep.subr.mxu0 0.0
        %187 = vmatpush1.xpose.msra.mxu0 0.0
        %188 = vmatprep.subr.mxu0 0.0
        %189 = vmatpush1.xpose.msra.mxu0 0.0
        %190 = vmatprep.subr.mxu0 0.0
        %191 = vmatpush1.xpose.msra.mxu0 0.0
        %192 = vmatprep.subr.mxu0 0.0
        %193 = vmatpush1.xpose.msra.mxu0 0.0
        %194 = vmatprep.subr.mxu0 0.0
        %195 = vmatpush1.xpose.msra.mxu0 0.0
        %196 = vmatprep.subr.mxu0 0.0
        %197 = vmatpush1.xpose.msra.mxu0 0.0
        %198 = vmatprep.subr.mxu0 0.0
        %199 = vmatpush1.xpose.msra.mxu0 0.0
        %200 = vmatprep.subr.mxu0 0.0
        %201 = vmatpush1.xpose.msra.mxu0 0.0
        %202 = vmatprep.subr.mxu0 0.0
        %203 = vmatpush1.xpose.msra.mxu0 0.0
        %204 = vmatprep.subr.mxu0 0.0
        %205 = vmatpush1.xpose.msra.mxu0 0.0
        %206 = vmatprep.subr.mxu0 0.0
        %207 = vmatpush1.xpose.msra.mxu0 0.0
        %208 = vmatprep.subr.mxu0 0.0
        %209 = vmatpush1.xpose.msra.mxu0 0.0
        %210 = vmatprep.subr.mxu0 0.0
        %211 = vmatpush1.xpose.msra.mxu0 0.0
        %212 = vmatprep.subr.mxu0 0.0
        %213 = vmatpush1.xpose.msra.mxu0 0.0
        %214 = vmatprep.subr.mxu0 0.0
        %215 = vmatpush1.xpose.msra.mxu0 0.0
        %216 = vmatprep.subr.mxu0 0.0
        %217 = vmatpush1.xpose.msra.mxu0 0.0
        %218 = vmatprep.subr.mxu0 0.0
        %219 = vmatpush1.xpose.msra.mxu0 0.0
        %220 = vmatprep.subr.mxu0 0.0
        %221 = vmatpush1.xpose.msra.mxu0 0.0
        %222 = vmatprep.subr.mxu0 0.0
        %223 = vmatpush1.xpose.msra.mxu0 0.0
        %224 = vmatprep.subr.mxu0 0.0
        %225 = vmatpush1.xpose.msra.mxu0 0.0
        %226 = vmatprep.subr.mxu0 0.0
        %227 = vmatpush1.xpose.msra.mxu0 0.0
        %228 = vmatprep.subr.mxu0 0.0
        %229 = vmatpush1.xpose.msra.mxu0 0.0
        %230 = vmatprep.subr.mxu0 0.0
        %231 = vmatpush1.xpose.msra.mxu0 0.0
        %232 = vmatprep.subr.mxu0 0.0
        %233 = vmatpush1.xpose.msra.mxu0 0.0
        %234 = vmatprep.subr.mxu0 0.0
        %235 = vmatpush1.xpose.msra.mxu0 0.0
        %236 = vmatprep.subr.mxu0 0.0
        %237 = vmatpush1.xpose.msra.mxu0 0.0
        %238 = vmatprep.subr.mxu0 0.0
        %239 = vmatpush1.xpose.msra.mxu0 0.0
        %240 = vmatprep.subr.mxu0 0.0
        %241 = vmatpush1.xpose.msra.mxu0 0.0
        %242 = vmatprep.subr.mxu0 0.0
        %243 = vmatpush1.xpose.msra.mxu0 0.0
        %244 = vmatprep.mubr.f32.mxu0 0.0
        %245 = vmatmul.mubr.f32.gmra.mrb[0].mxu0 %v175
        %v246 = vpop.f32.mrb[0].mxu0
        %v247 = vadd.f32 0.0, %v246
        %v248 = vpop.f32.mrb[0].mxu0
        %249 = vdwg.mxu0
        %vm250 = vcmask 64512
        %v251 = vsel %vm250, %v247, -inf
        %252 = vmax.xlane.f32.xlu0 %v251
        %v253 = vpop.xlane.xlu0 %252
        %v254 = vsub.f32 %v247, %v253
        %v255 = vmul.f32 %v254, 1.442695
        %v256 = vpow.pop %v255
        %v258 = vsel %vm250, %v256, 0
        %260 = vmatprep.subr.mxu0 0.0
        %261 = vmatpush1.msra.mxu0 %v160
        %262 = vmatprep.subr.mxu0 0.0
        %263 = vmatpush1.msra.mxu0 0.0
        %264 = vmatprep.subr.mxu0 0.0
        %265 = vmatpush1.msra.mxu0 0.0
        %266 = vmatprep.subr.mxu0 0.0
        %267 = vmatpush1.msra.mxu0 0.0
        %268 = vmatprep.subr.mxu0 0.0
        %269 = vmatpush1.msra.mxu0 0.0
        %270 = vmatprep.subr.mxu0 0.0
        %271 = vmatpush1.msra.mxu0 0.0
        %272 = vmatprep.subr.mxu0 0.0
        %273 = vmatpush1.msra.mxu0 0.0
        %274 = vmatprep.subr.mxu0 0.0
        %275 = vmatpush1.msra.mxu0 0.0
        %276 = vmatprep.subr.mxu0 0.0
        %277 = vmatpush1.msra.mxu0 0.0
        %278 = vmatprep.subr.mxu0 0.0
        %279 = vmatpush1.msra.mxu0 0.0
        %280 = vmatprep.subr.mxu0 0.0
        %281 = vmatpush1.msra.mxu0 0.0
        %282 = vmatprep.subr.mxu0 0.0
        %283 = vmatpush1.msra.mxu0 0.0
        %284 = vmatprep.subr.mxu0 0.0
        %285 = vmatpush1.msra.mxu0 0.0
        %286 = vmatprep.subr.mxu0 0.0
        %287 = vmatpush1.msra.mxu0 0.0
        %288 = vmatprep.subr.mxu0 0.0
        %289 = vmatpush1.msra.mxu0 0.0
        %290 = vmatprep.subr.mxu0 0.0
        %291 = vmatpush1.msra.mxu0 0.0
        %292 = vmatprep.subr.mxu0 0.0
        %293 = vmatpush1.msra.mxu0 0.0
        %294 = vmatprep.subr.mxu0 0.0
        %295 = vmatpush1.msra.mxu0 0.0
        %296 = vmatprep.subr.mxu0 0.0
        %297 = vmatpush1.msra.mxu0 0.0
        %298 = vmatprep.subr.mxu0 0.0
        %299 = vmatpush1.msra.mxu0 0.0
        %300 = vmatprep.subr.mxu0 0.0
        %301 = vmatpush1.msra.mxu0 0.0
        %302 = vmatprep.subr.mxu0 0.0
        %303 = vmatpush1.msra.mxu0 0.0
        %304 = vmatprep.subr.mxu0 0.0
        %305 = vmatpush1.msra.mxu0 0.0
        %306 = vmatprep.subr.mxu0 0.0
        %307 = vmatpush1.msra.mxu0 0.0
        %308 = vmatprep.subr.mxu0 0.0
        %309 = vmatpush1.msra.mxu0 0.0
        %310 = vmatprep.subr.mxu0 0.0
        %311 = vmatpush1.msra.mxu0 0.0
        %312 = vmatprep.subr.mxu0 0.0
        %313 = vmatpush1.msra.mxu0 0.0
        %314 = vmatprep.subr.mxu0 0.0
        %315 = vmatpush1.msra.mxu0 0.0
        %316 = vmatprep.subr.mxu0 0.0
        %317 = vmatpush1.msra.mxu0 0.0
        %318 = vmatprep.subr.mxu0 0.0
        %319 = vmatpush1.msra.mxu0 0.0
        %320 = vmatprep.subr.mxu0 0.0
        %321 = vmatpush1.msra.mxu0 0.0
        %322 = vmatprep.subr.mxu0 0.0
        %323 = vmatpush1.msra.mxu0 0.0
        %324 = vmatprep.mubr.f32.mxu0 0.0
        %325 = vmatmul.mubr.f32.gmra.mrb[0].mxu0 %v258
        %v326 = vpop.f32.mrb[0].mxu0
        %v327 = vadd.f32 0.0, %v326
        %v328 = vpop.f32.mrb[0].mxu0
        %329 = vdwg.mxu0
        %v330 = vmul.f32 %v327, %v327
        %v331 = vsel %vm173, %v330, 0.0
        %332 = vadd.xlane.f32.xlu0 %v331
        %v333 = vpop.xlane.xlu0 %332
        %v334 = vmul.f32 %v330, 2.0
        %v335 = vsub.f32 %v333, %v334
        %v336 = vand.u32 2147483647, %v335
        %v337 = vmax.f32 %v336, 1e-08
        %v338 = vrsqrt.pop %v337
        %340 = vset.pattern.permute.xlu0 0
        %341 = vperm.xlu0 %340, %v338
        %v342 = vpop.permute.xlu0 %341
        %v344 = vmul.f32 %v327, %v342
        %345 = vst.msk [vmem:[%s159] sm:$0xff] %vm173, %v344
        %s346 = sand.u32 %s75, 1
        %s347 = scalar_lea.sflag [#allocation5], %s346
        %s348 = sand.u32 %s75, 1
        %s349 = smul.addr %s348, 8
        %s350 = scalar_lea.vmem [#allocation6], %s349
        // Predicated region
        $region33: #{tpu_custom_call.1} parent=27 // pred_check
          %p351 = pneg %p85
        $region34: #{tpu_custom_call.1} parent=27 // pred_check_branch
          %353 = sbr.rel (%p351) target = $region36
        $region35: #{tpu_custom_call.1} parent=27 // pred_region
          %s355 = ssub.s32 128, 128
          %356 = vsyncadd %s347, %s355
          %s357 = smul.addr %s20, 128
          %s358 = scalar_lea.hbm %s2, %s357
          %s360 = sshll.u32 %s350, 4
          %s361 = int_to_ptr.vmem [resolvable:$true] %s360
          %363 = dma.vmem_to_hbm [thread:$0]  %s361, 128, %s358, %s347
        $region36: #{tpu_custom_call.1} parent=27 // pred_fallthru
          _
      $region28: #{tpu_custom_call.1} parent=5 // pred_fallthru
        _
      %p364 = scmp.le.s32.totalorder 2, %s15
      // Predicated region
      $region37: #{tpu_custom_call.1} parent=5 // pred_check
        %p365 = pneg %p364
      $region38: #{tpu_custom_call.1} parent=5 // pred_check_branch
        %367 = sbr.rel (%p365) target = $region40
      $region39: #{tpu_custom_call.1} parent=5 // pred_region
        %s368 = ssub.s32 %s15, 2
        // Predicated region
        $region41: #{tpu_custom_call.1} parent=39 // pred_check
          %p369 = pneg %p91
        $region42: #{tpu_custom_call.1} parent=39 // pred_check_branch
          %371 = sbr.rel (%p369) target = $region44
        $region43: #{tpu_custom_call.1} parent=39 // pred_region
          %s372 = sand.u32 %s76, 1
          %s373 = scalar_lea.sflag [#allocation5], %s372
          %s374 = sand.u32 %s76, 1
          %s375 = smul.addr %s374, 8
          %s376 = scalar_lea.vmem [#allocation6], %s375
          %377 = dma.done %s373, 128
        $region44: #{tpu_custom_call.1} parent=39 // pred_fallthru
          _
      $region40: #{tpu_custom_call.1} parent=5 // pred_fallthru
        _
    $region6: #{tpu_custom_call.1} parent=1 // loop_footer
      %s19 = sadd.s32 1, %s15
    $region7: #{tpu_custom_call.1} parent=1 // loop_footer_branch
      %14 = sbr.rel target = $region3
    $region8: #{tpu_custom_call.1} parent=1 // loop_exit
      _
    %378 = vsyncpa [#allocation4], 1
    %s379 = scalar_lea.sflag [#allocation4], 1
    %380 = vsyncpa %s379, 1
    %381 = vsyncpa [#allocation5], 1
    %s382 = scalar_lea.sflag [#allocation5], 1
    %383 = vsyncpa %s382, 1

</llo_original>
